<compile_context>
chip_gen: v7x
topology: tpu7x:2x2x1
jax: 0.10.0
libtpu: 0.0.40
codegen_flags: <defaults>
</compile_context>

<pallas_src>
import functools

import jax
import jax.numpy as jnp
from jax import lax
from jax.experimental import pallas as pl
from jax.experimental.pallas import tpu as pltpu


_N_INFLIGHT_ROW_DMAS = 8  # rolling window of outstanding row fetches (DMA path)


def _round_up(x, m):
    return ((x + m - 1) // m) * m


def _vmem_budget_bytes():
    """~75% of physical per-core VMEM (96 MiB on v5e/v6e, 48 MiB on v7x)."""
    try:
        cap = int(pltpu.get_tpu_info().vmem_capacity_bytes)
    except Exception:
        cap = 64 * 1024 * 1024  # assume the smallest (v7x-like) part
    return (cap * 3) // 4


# ---------------------------------------------------------------------------
# Path 1: small-vocab fast path — one-hot x table on the MXU.
# ---------------------------------------------------------------------------
def _embed_onehot_kernel(ids_ref, emb_ref, out_ref):
    # ids_ref : VMEM (TM, 1) int32  per-tile token ids
    # emb_ref : VMEM (V, D)         full table (constant block, single-buffered)
    # out_ref : VMEM (TM, D)
    v = emb_ref.shape[0]
    ids = jnp.clip(ids_ref[...], 0, v - 1)                     # (TM, 1)

    # (1, V) iota broadcast against the (TM, 1) ids: the only (TM, V) tensors
    # are the bool compare and the one-hot itself (no TM*V int32 iota).
    col = lax.broadcasted_iota(jnp.int32, (1, v), 1)            # (1, V)
    onehot = (ids == col).astype(emb_ref.dtype)                 # (TM, V)

    # Exactness: bf16 0/1 x bf16 table is exact at full rate; f32 tables use
    # HIGHEST so no table mantissa bits are dropped by the MXU emulation.
    prec = lax.Precision.HIGHEST if emb_ref.dtype == jnp.float32 else None
    out_ref[...] = jnp.dot(
        onehot, emb_ref[...],
        preferred_element_type=jnp.float32, precision=prec,
    ).astype(out_ref.dtype)


# ---------------------------------------------------------------------------
# Path 2: scalable path — HBM-resident table, SMEM ids, per-row DMA gather.
# ---------------------------------------------------------------------------
def _embed_dma_gather_kernel(ids_ref, emb_hbm, out_ref, sem, *, tm, vocab):
    # ids_ref : SMEM (total_padded,) int32 (scalar-prefetched ids, whole array)
    # emb_hbm : HBM  (V, D) table (memory_space=pl.ANY, never copied wholesale)
    # out_ref : VMEM (TM, D) output tile
    # sem     : DMA semaphores (nsem,)
    base = pl.program_id(0) * tm
    nsem = min(_N_INFLIGHT_ROW_DMAS, tm)

    def row_copy(r):
        idx = jnp.clip(ids_ref[base + r], 0, vocab - 1)
        return pltpu.make_async_copy(emb_hbm.at[idx], out_ref.at[r],
                                     sem.at[r % nsem])

    @pl.loop(0, nsem)                      # prime the in-flight window
    def _(r):
        row_copy(r).start()

    @pl.loop(nsem, tm)                     # steady state: wait oldest, start next
    def _(r):
        row_copy(r - nsem).wait()
        row_copy(r).start()

    @pl.loop(tm - nsem, tm)                # drain
    def _(r):
        row_copy(r).wait()


# ---------------------------------------------------------------------------
# Wrapper
# ---------------------------------------------------------------------------
def _choose_tile_tokens(total, V, D, itemsize, use_onehot, budget, max_tile):
    if use_onehot:
        fixed = V * D * itemsize                # single-buffered table block
        per_tok = (2 * D * itemsize             # double-buffered (TM, D) out tile
                   + 4 * D                      # f32 dot result before the cast
                   + 4 * V + V                  # one-hot (f32) + bool compare
                   + 2 * 4 * 128)               # (TM, 1) id column pads to 128 lanes
    else:
        fixed = 0                               # table stays in HBM
        per_tok = 2 * D * itemsize              # double-buffered out tile only
    slack = 2 * 1024 * 1024                     # compiler scratch / misc headroom
    tm = min(max_tile, _round_up(total, 8))
    while tm > 8 and fixed + tm * per_tok + slack > budget:
        tm = max(8, _round_up(tm // 2, 8))
    return tm


def word_embedding(ids, matrix, *, max_tile_tokens=512, one_hot_max_vocab=1024,
                   core_parallel=False):
    """Pallas equivalent of WordEmbedding.forward: matrix[ids.long()].

    ids    : (B, S) integer array
    matrix : (V, D) float embedding table
    returns (B, S, D) in matrix.dtype
    """
    B, S = ids.shape
    V, D = matrix.shape
    total = B * S
    itemsize = jnp.dtype(matrix.dtype).itemsize

    budget = _vmem_budget_bytes()
    table_bytes = V * D * itemsize
    # One-hot only pays off for small vocabularies (cost is O(TM*V*D) MXU
    # flops); everything else goes through the HBM-roofline DMA gather.
    # TODO(synk): on v5e lower the crossover to ~256 (weaker MXU, single vst slot).
    use_onehot = (V <= one_hot_max_vocab) and (table_bytes <= budget // 2)

    tm = _choose_tile_tokens(total, V, D, itemsize, use_onehot, budget,
                             max_tile_tokens)
    total_padded = _round_up(total, tm)

    ids_flat = ids.reshape(total).astype(jnp.int32)
    if total_padded != total:
        ids_flat = jnp.pad(ids_flat, (0, total_padded - total))

    grid = (total_padded // tm,)
    # Disjoint output tiles: token axis is parallel. On v7x, CORE_PARALLEL
    # shards it across the two TensorCores.
    sem_axes = (pltpu.CORE_PARALLEL,) if core_parallel else ("parallel",)
    cparams = pltpu.CompilerParams(dimension_semantics=sem_axes,
                                   vmem_limit_bytes=budget)

    if use_onehot:
        ids_col = ids_flat.reshape(total_padded, 1)
        cost = pl.CostEstimate(
            flops=2 * total_padded * V * D,
            transcendentals=0,
            bytes_accessed=total_padded * 4 + table_bytes
                           + total_padded * D * itemsize)
        out_flat = pl.pallas_call(
            _embed_onehot_kernel,
            out_shape=jax.ShapeDtypeStruct((total_padded, D), matrix.dtype),
            grid=grid,
            in_specs=[
                # Per-tile id column ((TM,1) int32; pads to 128 lanes in VMEM —
                # acceptable on this small-vocab path; the scalable path keeps
                # ids in SMEM instead).
                pl.BlockSpec((tm, 1), lambda i: (i, 0)),
                # Full table, constant block index -> fetched once; single
                # buffered so it doesn't reserve 2x table_bytes of VMEM.
                pl.BlockSpec((V, D), lambda i: (0, 0),
                             pipeline_mode=pl.Buffered(buffer_count=1)),
            ],
            out_specs=pl.BlockSpec((tm, D), lambda i: (i, 0)),
            compiler_params=cparams,
            cost_estimate=cost,
        )(ids_col, matrix)
    else:
        # Memory-bound gather: ~0 flops, 2*total*D*itemsize HBM traffic.
        # TODO(synk): for very large B*S the scalar-prefetched id vector can
        # outgrow SMEM; block the ids or chunk the call along tokens.
        cost = pl.CostEstimate(
            flops=0,
            transcendentals=0,
            bytes_accessed=total_padded * 4 + 2 * total_padded * D * itemsize)
        kernel = functools.partial(_embed_dma_gather_kernel, tm=tm, vocab=V)
        out_flat = pl.pallas_call(
            kernel,
            out_shape=jax.ShapeDtypeStruct((total_padded, D), matrix.dtype),
            grid_spec=pltpu.PrefetchScalarGridSpec(
                num_scalar_prefetch=1,                 # ids -> SMEM
                grid=grid,
                in_specs=[pl.BlockSpec(memory_space=pl.ANY)],  # table stays in HBM
                out_specs=pl.BlockSpec((tm, D), lambda i, ids: (i, 0)),
                scratch_shapes=[
                    pltpu.SemaphoreType.DMA((min(_N_INFLIGHT_ROW_DMAS, tm),))],
            ),
            compiler_params=cparams,
            cost_estimate=cost,
        )(ids_flat, matrix)

    return out_flat[:total].reshape(B, S, D)


if __name__ == "__main__":
    key = jax.random.PRNGKey(0)
    k_mat, k_ids = jax.random.split(key)

    vocab_size = 32
    embedding_dim = 128
    batch, seq = 2, 8

    # Deterministic "matrix" argument of WordEmbedding.__init__
    matrix = jax.random.normal(k_mat, (vocab_size, embedding_dim), dtype=jnp.float32)
    # Deterministic token-id input
    ids = jax.random.randint(k_ids, (batch, seq), 0, vocab_size, dtype=jnp.int32)

    out = word_embedding(ids, matrix)
    out = jax.block_until_ready(out)

    # Reference: plain gather (what nn.Embedding does in forward)
    ref = jnp.take(matrix, ids.reshape(-1), axis=0).reshape(batch, seq, embedding_dim)

    assert out.shape == (batch, seq, embedding_dim)
    assert out.dtype == jnp.float32
    assert jnp.allclose(out, ref), "mismatch vs reference gather"

    print("KERNEL_OK")
</pallas_src>

<mosaic_0001>
module attributes {stable_mosaic.version = 11 : i64} {
  func.func @_embed_onehot_kernel(%arg0: i32, %arg1: memref<16x1xi32, #tpu.memory_space<vmem>>, %arg2: memref<32x128xf32, #tpu.memory_space<vmem>>, %arg3: memref<16x128xf32, #tpu.memory_space<vmem>>) attributes {dimension_semantics = [#tpu.dimension_semantics<parallel>], iteration_bounds = array<i64: 1>, scalar_prefetch = 0 : i64, scratch_operands = 0 : i64, tpu.core_type = #tpu.core_type<tc>, window_params = [{transform_indices = @transform_0, window_bounds = array<i64: 16, 1>}, {pipeline_mode = #tpu.pipeline_mode<synchronous>, transform_indices = @transform_1, window_bounds = array<i64: 32, 128>}, {transform_indices = @transform_2, window_bounds = array<i64: 16, 128>}]} {
    %c0 = arith.constant 0 : index
    %c0_0 = arith.constant 0 : index
    %0 = vector.load %arg1[%c0, %c0_0] : memref<16x1xi32, #tpu.memory_space<vmem>>, vector<16x1xi32>
    %c0_i32 = arith.constant 0 : i32
    %c31_i32 = arith.constant 31 : i32
    %1 = vector.broadcast %c0_i32 : i32 to vector<16x1xi32>
    %2 = arith.maxsi %1, %0 : vector<16x1xi32>
    %3 = vector.broadcast %c31_i32 : i32 to vector<16x1xi32>
    %4 = arith.minsi %3, %2 : vector<16x1xi32>
    %5 = tpu.iota {dimensions = array<i32: 1>} : vector<1x32xi32>
    %6 = vector.broadcast %4 : vector<16x1xi32> to vector<16x32xi32>
    %7 = vector.broadcast %5 : vector<1x32xi32> to vector<16x32xi32>
    %8 = arith.cmpi eq, %6, %7 : vector<16x32xi32>
    %9 = arith.extui %8 : vector<16x32xi1> to vector<16x32xi32>
    %10 = arith.sitofp %9 : vector<16x32xi32> to vector<16x32xf32>
    %c0_1 = arith.constant 0 : index
    %c0_2 = arith.constant 0 : index
    %11 = vector.load %arg2[%c0_1, %c0_2] : memref<32x128xf32, #tpu.memory_space<vmem>>, vector<32x128xf32>
    %cst = arith.constant dense<0.000000e+00> : vector<16x128xf32>
    %12 = tpu.matmul %10, %11, %cst {dimension_numbers = #tpu.dot_dimension_numbers<[1], [0], [0], [1], [0, 0, 1, 1], [], []>, precision = #tpu.contract_precision<fp32>} : vector<16x32xf32>, vector<32x128xf32>, vector<16x128xf32> -> vector<16x128xf32>
    %c0_3 = arith.constant 0 : index
    %c0_4 = arith.constant 0 : index
    %13 = vector.load %arg3[%c0_3, %c0_4] : memref<16x128xf32, #tpu.memory_space<vmem>>, vector<16x128xf32>
    tpu.vector_store %arg3[%c0_3, %c0_4], %12 {strides = array<i32>} : memref<16x128xf32, #tpu.memory_space<vmem>>, vector<16x128xf32>,
    return
  }
  func.func @transform_0(%arg0: i32) -> (i32, i32) {
    %c0_i32 = arith.constant 0 : i32
    %c0_i32_0 = arith.constant 0 : i32
    return %arg0, %c0_i32 : i32, i32
  }
  func.func @transform_1(%arg0: i32) -> (i32, i32) {
    %c0_i32 = arith.constant 0 : i32
    %c0_i32_0 = arith.constant 0 : i32
    %c0_i32_1 = arith.constant 0 : i32
    return %c0_i32, %c0_i32_0 : i32, i32
  }
  func.func @transform_2(%arg0: i32) -> (i32, i32) {
    %c0_i32 = arith.constant 0 : i32
    %c0_i32_0 = arith.constant 0 : i32
    return %arg0, %c0_i32 : i32, i32
  }
}

</mosaic_0001>

<llo_original>
// kernel: tpu_custom_call.1
$region0: #{tpu_custom_call.1}
  #allocation0 [shape = 'u32[]', space=smem, size = 0x4, offset = 0x4, fixed_abs, tag = 'smem constant byte address 0x4 - core index']
  #allocation1 [shape = 'u32[144,128]{1,0:T(1,128)}', space=vmem, size = 0x12000, scoped, tag = 'internal scratch']
  %s0 = inlined_call_operand.vmem [shape: s32[16,1], index: 0, kind: input, shape index: {}]
  %s1 = inlined_call_operand.hbm [shape: f32[32,128], index: 1, kind: input, shape index: {}]
  %s2 = inlined_call_operand.hbm [shape: f32[16,128], index: 2, kind: output, shape index: {}]
  %s3 = sld [smem:[#allocation0]]
  $region22: #{tpu_custom_call.1} parent=0
    _
  %s5 = ssub.s32 1, %s3
  %s6 = scalar_select 0, %s5, %s3
  $region1: #{tpu_custom_call.1} parent=0
    #allocation2 [shape = 'u8[16384]{0}', space=vmem, size = 0x4000, scoped, tag = 'input window, operand 1, single buffered']
    #allocation3 [shape = 's32[1]{0}', space=sflag, size = 0x4, scoped, tag = 'scoped memory for tpu_custom_call.1']
    #allocation4 [shape = 's32[1]{0}', space=sflag, size = 0x4, scoped, tag = 'scoped memory for tpu_custom_call.1']
    #allocation5 [shape = 'u8[8192]{0}', space=vmem, size = 0x2000, scoped, tag = 'output window, operand 0, single buffered']
    %7 = vsyncpa [#allocation3], 0
    %8 = vsyncpa [#allocation4], 0
    // Predicated region
    $region2: #{tpu_custom_call.1} parent=1 // pred_check
      _
    $region3: #{tpu_custom_call.1} parent=1 // pred_check_branch
      %10 = sbr.rel (0) target = $region5
    $region4: #{tpu_custom_call.1} parent=1 // pred_region
      _
    $region5: #{tpu_custom_call.1} parent=1 // pred_fallthru
      _
    // Predicated region
    $region6: #{tpu_custom_call.1} parent=1 // pred_check
      _
    $region7: #{tpu_custom_call.1} parent=1 // pred_check_branch
      %12 = sbr.rel (0) target = $region9
    $region8: #{tpu_custom_call.1} parent=1 // pred_region
      %s14 = ssub.s32 512, 512
      %15 = vsyncadd [#allocation3], %s14
      %s16 = sshll.u32 [#allocation2], 4
      %s17 = int_to_ptr.vmem [resolvable:$true] %s16
      %22 = dma.hbm_to_vmem [thread:$0]  %s1, 512, %s17, [#allocation3], 128, 128, 8
    $region9: #{tpu_custom_call.1} parent=1 // pred_fallthru
      _
    // Predicated region
    $region10: #{tpu_custom_call.1} parent=1 // pred_check
      _
    $region11: #{tpu_custom_call.1} parent=1 // pred_check_branch
      %24 = sbr.rel (0) target = $region13
    $region12: #{tpu_custom_call.1} parent=1 // pred_region
      %25 = dma.done [#allocation3], 512
    $region13: #{tpu_custom_call.1} parent=1 // pred_fallthru
      _
    %v26 = vld [vmem:[%s0] sm:$0xff]
    %v27 = vld [vmem:[%s0 + $0x8] sm:$0xff]
    %vm28 = vcmp.gt.s32.totalorder %v26, 0
    %v29 = vsel %vm28, %v26, 0
    %vm30 = vcmp.gt.s32.totalorder %v27, 0
    %v31 = vsel %vm30, %v27, 0
    %vm32 = vcmp.lt.s32.totalorder %v29, 31
    %v33 = vsel %vm32, %v29, 31
    %vm34 = vcmp.lt.s32.totalorder %v31, 31
    %v35 = vsel %vm34, %v31, 31
    %v36 = vlaneseq
    %v37 = vand.u32 %v36, 127
    %38 = vset.pattern.permute.xlu0 0
    %39 = vperm.xlu0 %38, %v33
    %v40 = vpop.permute.xlu0 %39
    %41 = vset.pattern.permute.xlu0 0
    %42 = vperm.xlu0 %41, %v35
    %v43 = vpop.permute.xlu0 %42
    %vm44 = vcmp.eq.s32.totalorder %v40, %v37
    %vm45 = vcmp.eq.s32.totalorder %v43, %v37
    %v46 = vsel %vm44, 1, 0
    %v47 = vsel %vm45, 1, 0
    %v48 = vcvt.s32.f32 %v46
    %v49 = vcvt.s32.f32 %v47
    %v50 = vld [vmem:[#allocation2] sm:$0xff]
    %v51 = vld [vmem:[#allocation2 + $0x8] sm:$0xff]
    %v52 = vld [vmem:[#allocation2 + $0x10] sm:$0xff]
    %v53 = vld [vmem:[#allocation2 + $0x18] sm:$0xff]
    %vm54 = vcmask 261120
    %v56 = vsel %vm54, %v48, 0
    %v59 = vsel %vm54, %v49, 0
    %61 = vmatprep.subr.mxu0 0.0
    %v62 = vand.u32 %v50, 4294901760
    %63 = vmatpush1.msra.mxu0 %v62
    %64 = vmatprep.subr.mxu0 0.0
    %v65 = vand.u32 %v51, 4294901760
    %66 = vmatpush1.msra.mxu0 %v65
    %67 = vmatprep.subr.mxu0 0.0
    %v68 = vand.u32 %v52, 4294901760
    %69 = vmatpush1.msra.mxu0 %v68
    %70 = vmatprep.subr.mxu0 0.0
    %v71 = vand.u32 %v53, 4294901760
    %72 = vmatpush1.msra.mxu0 %v71
    %73 = vmatprep.subr.mxu0 0.0
    %74 = vmatpush1.msra.mxu0 0.0
    %75 = vmatprep.subr.mxu0 0.0
    %76 = vmatpush1.msra.mxu0 0.0
    %77 = vmatprep.subr.mxu0 0.0
    %78 = vmatpush1.msra.mxu0 0.0
    %79 = vmatprep.subr.mxu0 0.0
    %80 = vmatpush1.msra.mxu0 0.0
    %81 = vmatprep.subr.mxu0 0.0
    %82 = vmatpush1.msra.mxu0 0.0
    %83 = vmatprep.subr.mxu0 0.0
    %84 = vmatpush1.msra.mxu0 0.0
    %85 = vmatprep.subr.mxu0 0.0
    %86 = vmatpush1.msra.mxu0 0.0
    %87 = vmatprep.subr.mxu0 0.0
    %88 = vmatpush1.msra.mxu0 0.0
    %89 = vmatprep.subr.mxu0 0.0
    %90 = vmatpush1.msra.mxu0 0.0
    %91 = vmatprep.subr.mxu0 0.0
    %92 = vmatpush1.msra.mxu0 0.0
    %93 = vmatprep.subr.mxu0 0.0
    %94 = vmatpush1.msra.mxu0 0.0
    %95 = vmatprep.subr.mxu0 0.0
    %96 = vmatpush1.msra.mxu0 0.0
    %97 = vmatprep.subr.mxu0 0.0
    %98 = vmatpush1.msra.mxu0 0.0
    %99 = vmatprep.subr.mxu0 0.0
    %100 = vmatpush1.msra.mxu0 0.0
    %101 = vmatprep.subr.mxu0 0.0
    %102 = vmatpush1.msra.mxu0 0.0
    %103 = vmatprep.subr.mxu0 0.0
    %104 = vmatpush1.msra.mxu0 0.0
    %105 = vmatprep.subr.mxu0 0.0
    %106 = vmatpush1.msra.mxu0 0.0
    %107 = vmatprep.subr.mxu0 0.0
    %108 = vmatpush1.msra.mxu0 0.0
    %109 = vmatprep.subr.mxu0 0.0
    %110 = vmatpush1.msra.mxu0 0.0
    %111 = vmatprep.subr.mxu0 0.0
    %112 = vmatpush1.msra.mxu0 0.0
    %113 = vmatprep.subr.mxu0 0.0
    %114 = vmatpush1.msra.mxu0 0.0
    %115 = vmatprep.subr.mxu0 0.0
    %116 = vmatpush1.msra.mxu0 0.0
    %117 = vmatprep.subr.mxu0 0.0
    %118 = vmatpush1.msra.mxu0 0.0
    %119 = vmatprep.subr.mxu0 0.0
    %120 = vmatpush1.msra.mxu0 0.0
    %121 = vmatprep.subr.mxu0 0.0
    %122 = vmatpush1.msra.mxu0 0.0
    %123 = vmatprep.subr.mxu0 0.0
    %124 = vmatpush1.msra.mxu0 0.0
    %125 = vmatprep.subr.mxu0 0.0
    %126 = vmatpush1.msra.mxu0 0.0
    %127 = vmatprep.subr.mxu0 0.0
    %128 = vmatpush1.msra.mxu0 0.0
    %129 = vmatprep.mubr.f32.mxu0 0.0
    %v130 = vand.u32 %v56, 4294901760
    %v131 = vsub.f32 %v56, %v130
    %v132 = vand.u32 %v131, 4294901760
    %v133 = vsub.f32 %v131, %v132
    %v134 = vand.u32 %v133, 4294901760
    %135 = vmatmul.mubr.f32.gmra.mrb[0].mxu0 %v134
    %v136 = vpop.f32.mrb[0].mxu0
    %v137 = vadd.f32 0.0, %v136
    %v138 = vpop.f32.mrb[0].mxu0
    %139 = vmatprep.mubr.f32.mxu0 0.0
    %v140 = vand.u32 %v59, 4294901760
    %v141 = vsub.f32 %v59, %v140
    %v142 = vand.u32 %v141, 4294901760
    %v143 = vsub.f32 %v141, %v142
    %v144 = vand.u32 %v143, 4294901760
    %145 = vmatmul.mubr.f32.gmra.mrb[0].mxu0 %v144
    %v146 = vpop.f32.mrb[0].mxu0
    %v147 = vadd.f32 0.0, %v146
    %v148 = vpop.f32.mrb[0].mxu0
    %149 = vdwg.mxu0
    %150 = vmatprep.subr.mxu0 0.0
    %v151 = vand.u32 %v50, 4294901760
    %v152 = vsub.f32 %v50, %v151
    %v153 = vand.u32 %v152, 4294901760
    %v154 = vsub.f32 %v152, %v153
    %v155 = vand.u32 %v154, 4294901760
    %156 = vmatpush1.msra.mxu0 %v155
    %157 = vmatprep.subr.mxu0 0.0
    %v158 = vand.u32 %v51, 4294901760
    %v159 = vsub.f32 %v51, %v158
    %v160 = vand.u32 %v159, 4294901760
    %v161 = vsub.f32 %v159, %v160
    %v162 = vand.u32 %v161, 4294901760
    %163 = vmatpush1.msra.mxu0 %v162
    %164 = vmatprep.subr.mxu0 0.0
    %v165 = vand.u32 %v52, 4294901760
    %v166 = vsub.f32 %v52, %v165
    %v167 = vand.u32 %v166, 4294901760
    %v168 = vsub.f32 %v166, %v167
    %v169 = vand.u32 %v168, 4294901760
    %170 = vmatpush1.msra.mxu0 %v169
    %171 = vmatprep.subr.mxu0 0.0
    %v172 = vand.u32 %v53, 4294901760
    %v173 = vsub.f32 %v53, %v172
    %v174 = vand.u32 %v173, 4294901760
    %v175 = vsub.f32 %v173, %v174
    %v176 = vand.u32 %v175, 4294901760
    %177 = vmatpush1.msra.mxu0 %v176
    %178 = vmatprep.subr.mxu0 0.0
    %179 = vmatpush1.msra.mxu0 0.0
    %180 = vmatprep.subr.mxu0 0.0
    %181 = vmatpush1.msra.mxu0 0.0
    %182 = vmatprep.subr.mxu0 0.0
    %183 = vmatpush1.msra.mxu0 0.0
    %184 = vmatprep.subr.mxu0 0.0
    %185 = vmatpush1.msra.mxu0 0.0
    %186 = vmatprep.subr.mxu0 0.0
    %187 = vmatpush1.msra.mxu0 0.0
    %188 = vmatprep.subr.mxu0 0.0
    %189 = vmatpush1.msra.mxu0 0.0
    %190 = vmatprep.subr.mxu0 0.0
    %191 = vmatpush1.msra.mxu0 0.0
    %192 = vmatprep.subr.mxu0 0.0
    %193 = vmatpush1.msra.mxu0 0.0
    %194 = vmatprep.subr.mxu0 0.0
    %195 = vmatpush1.msra.mxu0 0.0
    %196 = vmatprep.subr.mxu0 0.0
    %197 = vmatpush1.msra.mxu0 0.0
    %198 = vmatprep.subr.mxu0 0.0
    %199 = vmatpush1.msra.mxu0 0.0
    %200 = vmatprep.subr.mxu0 0.0
    %201 = vmatpush1.msra.mxu0 0.0
    %202 = vmatprep.subr.mxu0 0.0
    %203 = vmatpush1.msra.mxu0 0.0
    %204 = vmatprep.subr.mxu0 0.0
    %205 = vmatpush1.msra.mxu0 0.0
    %206 = vmatprep.subr.mxu0 0.0
    %207 = vmatpush1.msra.mxu0 0.0
    %208 = vmatprep.subr.mxu0 0.0
    %209 = vmatpush1.msra.mxu0 0.0
    %210 = vmatprep.subr.mxu0 0.0
    %211 = vmatpush1.msra.mxu0 0.0
    %212 = vmatprep.subr.mxu0 0.0
    %213 = vmatpush1.msra.mxu0 0.0
    %214 = vmatprep.subr.mxu0 0.0
    %215 = vmatpush1.msra.mxu0 0.0
    %216 = vmatprep.subr.mxu0 0.0
    %217 = vmatpush1.msra.mxu0 0.0
    %218 = vmatprep.subr.mxu0 0.0
    %219 = vmatpush1.msra.mxu0 0.0
    %220 = vmatprep.subr.mxu0 0.0
    %221 = vmatpush1.msra.mxu0 0.0
    %222 = vmatprep.subr.mxu0 0.0
    %223 = vmatpush1.msra.mxu0 0.0
    %224 = vmatprep.subr.mxu0 0.0
    %225 = vmatpush1.msra.mxu0 0.0
    %226 = vmatprep.subr.mxu0 0.0
    %227 = vmatpush1.msra.mxu0 0.0
    %228 = vmatprep.subr.mxu0 0.0
    %229 = vmatpush1.msra.mxu0 0.0
    %230 = vmatprep.subr.mxu0 0.0
    %231 = vmatpush1.msra.mxu0 0.0
    %232 = vmatprep.subr.mxu0 0.0
    %233 = vmatpush1.msra.mxu0 0.0
    %234 = vmatprep.mubr.f32.mxu0 0.0
    %v235 = vand.u32 %v56, 4294901760
    %236 = vmatmul.mubr.f32.gmra.mrb[0].mxu0 %v235
    %v237 = vpop.f32.mrb[0].mxu0
    %v238 = vadd.f32 %v137, %v237
    %v239 = vpop.f32.mrb[0].mxu0
    %240 = vmatprep.mubr.f32.mxu0 0.0
    %v241 = vand.u32 %v59, 4294901760
    %242 = vmatmul.mubr.f32.gmra.mrb[0].mxu0 %v241
    %v243 = vpop.f32.mrb[0].mxu0
    %v244 = vadd.f32 %v147, %v243
    %v245 = vpop.f32.mrb[0].mxu0
    %246 = vdwg.mxu0
    %247 = vmatprep.subr.mxu0 0.0
    %v248 = vand.u32 %v50, 4294901760
    %v249 = vsub.f32 %v50, %v248
    %250 = vmatpush1.msra.mxu0 %v249
    %251 = vmatprep.subr.mxu0 0.0
    %v252 = vand.u32 %v51, 4294901760
    %v253 = vsub.f32 %v51, %v252
    %254 = vmatpush1.msra.mxu0 %v253
    %255 = vmatprep.subr.mxu0 0.0
    %v256 = vand.u32 %v52, 4294901760
    %v257 = vsub.f32 %v52, %v256
    %258 = vmatpush1.msra.mxu0 %v257
    %259 = vmatprep.subr.mxu0 0.0
    %v260 = vand.u32 %v53, 4294901760
    %v261 = vsub.f32 %v53, %v260
    %262 = vmatpush1.msra.mxu0 %v261
    %263 = vmatprep.subr.mxu0 0.0
    %264 = vmatpush1.msra.mxu0 0.0
    %265 = vmatprep.subr.mxu0 0.0
    %266 = vmatpush1.msra.mxu0 0.0
    %267 = vmatprep.subr.mxu0 0.0
    %268 = vmatpush1.msra.mxu0 0.0
    %269 = vmatprep.subr.mxu0 0.0
    %270 = vmatpush1.msra.mxu0 0.0
    %271 = vmatprep.subr.mxu0 0.0
    %272 = vmatpush1.msra.mxu0 0.0
    %273 = vmatprep.subr.mxu0 0.0
    %274 = vmatpush1.msra.mxu0 0.0
    %275 = vmatprep.subr.mxu0 0.0
    %276 = vmatpush1.msra.mxu0 0.0
    %277 = vmatprep.subr.mxu0 0.0
    %278 = vmatpush1.msra.mxu0 0.0
    %279 = vmatprep.subr.mxu0 0.0
    %280 = vmatpush1.msra.mxu0 0.0
    %281 = vmatprep.subr.mxu0 0.0
    %282 = vmatpush1.msra.mxu0 0.0
    %283 = vmatprep.subr.mxu0 0.0
    %284 = vmatpush1.msra.mxu0 0.0
    %285 = vmatprep.subr.mxu0 0.0
    %286 = vmatpush1.msra.mxu0 0.0
    %287 = vmatprep.subr.mxu0 0.0
    %288 = vmatpush1.msra.mxu0 0.0
    %289 = vmatprep.subr.mxu0 0.0
    %290 = vmatpush1.msra.mxu0 0.0
    %291 = vmatprep.subr.mxu0 0.0
    %292 = vmatpush1.msra.mxu0 0.0
    %293 = vmatprep.subr.mxu0 0.0
    %294 = vmatpush1.msra.mxu0 0.0
    %295 = vmatprep.subr.mxu0 0.0
    %296 = vmatpush1.msra.mxu0 0.0
    %297 = vmatprep.subr.mxu0 0.0
    %298 = vmatpush1.msra.mxu0 0.0
    %299 = vmatprep.subr.mxu0 0.0
    %300 = vmatpush1.msra.mxu0 0.0
    %301 = vmatprep.subr.mxu0 0.0
    %302 = vmatpush1.msra.mxu0 0.0
    %303 = vmatprep.subr.mxu0 0.0
    %304 = vmatpush1.msra.mxu0 0.0
    %305 = vmatprep.subr.mxu0 0.0
    %306 = vmatpush1.msra.mxu0 0.0
    %307 = vmatprep.subr.mxu0 0.0
    %308 = vmatpush1.msra.mxu0 0.0
    %309 = vmatprep.subr.mxu0 0.0
    %310 = vmatpush1.msra.mxu0 0.0
    %311 = vmatprep.subr.mxu0 0.0
    %312 = vmatpush1.msra.mxu0 0.0
    %313 = vmatprep.subr.mxu0 0.0
    %314 = vmatpush1.msra.mxu0 0.0
    %315 = vmatprep.subr.mxu0 0.0
    %316 = vmatpush1.msra.mxu0 0.0
    %317 = vmatprep.subr.mxu0 0.0
    %318 = vmatpush1.msra.mxu0 0.0
    %319 = vmatprep.mubr.f32.mxu0 0.0
    %v320 = vand.u32 %v56, 4294901760
    %v321 = vsub.f32 %v56, %v320
    %322 = vmatmul.mubr.f32.gmra.mrb[0].mxu0 %v321
    %v323 = vpop.f32.mrb[0].mxu0
    %v324 = vadd.f32 %v238, %v323
    %v325 = vpop.f32.mrb[0].mxu0
    %326 = vmatprep.mubr.f32.mxu0 0.0
    %v327 = vand.u32 %v59, 4294901760
    %v328 = vsub.f32 %v59, %v327
    %329 = vmatmul.mubr.f32.gmra.mrb[0].mxu0 %v328
    %v330 = vpop.f32.mrb[0].mxu0
    %v331 = vadd.f32 %v244, %v330
    %v332 = vpop.f32.mrb[0].mxu0
    %333 = vdwg.mxu0
    %334 = vmatprep.subr.mxu0 0.0
    %v335 = vand.u32 %v50, 4294901760
    %336 = vmatpush1.msra.mxu0 %v335
    %337 = vmatprep.subr.mxu0 0.0
    %v338 = vand.u32 %v51, 4294901760
    %339 = vmatpush1.msra.mxu0 %v338
    %340 = vmatprep.subr.mxu0 0.0
    %v341 = vand.u32 %v52, 4294901760
    %342 = vmatpush1.msra.mxu0 %v341
    %343 = vmatprep.subr.mxu0 0.0
    %v344 = vand.u32 %v53, 4294901760
    %345 = vmatpush1.msra.mxu0 %v344
    %346 = vmatprep.subr.mxu0 0.0
    %347 = vmatpush1.msra.mxu0 0.0
    %348 = vmatprep.subr.mxu0 0.0
    %349 = vmatpush1.msra.mxu0 0.0
    %350 = vmatprep.subr.mxu0 0.0
    %351 = vmatpush1.msra.mxu0 0.0
    %352 = vmatprep.subr.mxu0 0.0
    %353 = vmatpush1.msra.mxu0 0.0
    %354 = vmatprep.subr.mxu0 0.0
    %355 = vmatpush1.msra.mxu0 0.0
    %356 = vmatprep.subr.mxu0 0.0
    %357 = vmatpush1.msra.mxu0 0.0
    %358 = vmatprep.subr.mxu0 0.0
    %359 = vmatpush1.msra.mxu0 0.0
    %360 = vmatprep.subr.mxu0 0.0
    %361 = vmatpush1.msra.mxu0 0.0
    %362 = vmatprep.subr.mxu0 0.0
    %363 = vmatpush1.msra.mxu0 0.0
    %364 = vmatprep.subr.mxu0 0.0
    %365 = vmatpush1.msra.mxu0 0.0
    %366 = vmatprep.subr.mxu0 0.0
    %367 = vmatpush1.msra.mxu0 0.0
    %368 = vmatprep.subr.mxu0 0.0
    %369 = vmatpush1.msra.mxu0 0.0
    %370 = vmatprep.subr.mxu0 0.0
    %371 = vmatpush1.msra.mxu0 0.0
    %372 = vmatprep.subr.mxu0 0.0
    %373 = vmatpush1.msra.mxu0 0.0
    %374 = vmatprep.subr.mxu0 0.0
    %375 = vmatpush1.msra.mxu0 0.0
    %376 = vmatprep.subr.mxu0 0.0
    %377 = vmatpush1.msra.mxu0 0.0
    %378 = vmatprep.subr.mxu0 0.0
    %379 = vmatpush1.msra.mxu0 0.0
    %380 = vmatprep.subr.mxu0 0.0
    %381 = vmatpush1.msra.mxu0 0.0
    %382 = vmatprep.subr.mxu0 0.0
    %383 = vmatpush1.msra.mxu0 0.0
    %384 = vmatprep.subr.mxu0 0.0
    %385 = vmatpush1.msra.mxu0 0.0
    %386 = vmatprep.subr.mxu0 0.0
    %387 = vmatpush1.msra.mxu0 0.0
    %388 = vmatprep.subr.mxu0 0.0
    %389 = vmatpush1.msra.mxu0 0.0
    %390 = vmatprep.subr.mxu0 0.0
    %391 = vmatpush1.msra.mxu0 0.0
    %392 = vmatprep.subr.mxu0 0.0
    %393 = vmatpush1.msra.mxu0 0.0
    %394 = vmatprep.subr.mxu0 0.0
    %395 = vmatpush1.msra.mxu0 0.0
    %396 = vmatprep.subr.mxu0 0.0
    %397 = vmatpush1.msra.mxu0 0.0
    %398 = vmatprep.subr.mxu0 0.0
    %399 = vmatpush1.msra.mxu0 0.0
    %400 = vmatprep.subr.mxu0 0.0
    %401 = vmatpush1.msra.mxu0 0.0
    %402 = vmatprep.mubr.f32.mxu0 0.0
    %v403 = vand.u32 %v56, 4294901760
    %v404 = vsub.f32 %v56, %v403
    %v405 = vand.u32 %v404, 4294901760
    %406 = vmatmul.mubr.f32.gmra.mrb[0].mxu0 %v405
    %v407 = vpop.f32.mrb[0].mxu0
    %v408 = vadd.f32 %v324, %v407
    %v409 = vpop.f32.mrb[0].mxu0
    %410 = vmatprep.mubr.f32.mxu0 0.0
    %v411 = vand.u32 %v59, 4294901760
    %v412 = vsub.f32 %v59, %v411
    %v413 = vand.u32 %v412, 4294901760
    %414 = vmatmul.mubr.f32.gmra.mrb[0].mxu0 %v413
    %v415 = vpop.f32.mrb[0].mxu0
    %v416 = vadd.f32 %v331, %v415
    %v417 = vpop.f32.mrb[0].mxu0
    %418 = vdwg.mxu0
    %419 = vmatprep.subr.mxu0 0.0
    %v420 = vand.u32 %v50, 4294901760
    %v421 = vsub.f32 %v50, %v420
    %v422 = vand.u32 %v421, 4294901760
    %423 = vmatpush1.msra.mxu0 %v422
    %424 = vmatprep.subr.mxu0 0.0
    %v425 = vand.u32 %v51, 4294901760
    %v426 = vsub.f32 %v51, %v425
    %v427 = vand.u32 %v426, 4294901760
    %428 = vmatpush1.msra.mxu0 %v427
    %429 = vmatprep.subr.mxu0 0.0
    %v430 = vand.u32 %v52, 4294901760
    %v431 = vsub.f32 %v52, %v430
    %v432 = vand.u32 %v431, 4294901760
    %433 = vmatpush1.msra.mxu0 %v432
    %434 = vmatprep.subr.mxu0 0.0
    %v435 = vand.u32 %v53, 4294901760
    %v436 = vsub.f32 %v53, %v435
    %v437 = vand.u32 %v436, 4294901760
    %438 = vmatpush1.msra.mxu0 %v437
    %439 = vmatprep.subr.mxu0 0.0
    %440 = vmatpush1.msra.mxu0 0.0
    %441 = vmatprep.subr.mxu0 0.0
    %442 = vmatpush1.msra.mxu0 0.0
    %443 = vmatprep.subr.mxu0 0.0
    %444 = vmatpush1.msra.mxu0 0.0
    %445 = vmatprep.subr.mxu0 0.0
    %446 = vmatpush1.msra.mxu0 0.0
    %447 = vmatprep.subr.mxu0 0.0
    %448 = vmatpush1.msra.mxu0 0.0
    %449 = vmatprep.subr.mxu0 0.0
    %450 = vmatpush1.msra.mxu0 0.0
    %451 = vmatprep.subr.mxu0 0.0
    %452 = vmatpush1.msra.mxu0 0.0
    %453 = vmatprep.subr.mxu0 0.0
    %454 = vmatpush1.msra.mxu0 0.0
    %455 = vmatprep.subr.mxu0 0.0
    %456 = vmatpush1.msra.mxu0 0.0
    %457 = vmatprep.subr.mxu0 0.0
    %458 = vmatpush1.msra.mxu0 0.0
    %459 = vmatprep.subr.mxu0 0.0
    %460 = vmatpush1.msra.mxu0 0.0
    %461 = vmatprep.subr.mxu0 0.0
    %462 = vmatpush1.msra.mxu0 0.0
    %463 = vmatprep.subr.mxu0 0.0
    %464 = vmatpush1.msra.mxu0 0.0
    %465 = vmatprep.subr.mxu0 0.0
    %466 = vmatpush1.msra.mxu0 0.0
    %467 = vmatprep.subr.mxu0 0.0
    %468 = vmatpush1.msra.mxu0 0.0
    %469 = vmatprep.subr.mxu0 0.0
    %470 = vmatpush1.msra.mxu0 0.0
    %471 = vmatprep.subr.mxu0 0.0
    %472 = vmatpush1.msra.mxu0 0.0
    %473 = vmatprep.subr.mxu0 0.0
    %474 = vmatpush1.msra.mxu0 0.0
    %475 = vmatprep.subr.mxu0 0.0
    %476 = vmatpush1.msra.mxu0 0.0
    %477 = vmatprep.subr.mxu0 0.0
    %478 = vmatpush1.msra.mxu0 0.0
    %479 = vmatprep.subr.mxu0 0.0
    %480 = vmatpush1.msra.mxu0 0.0
    %481 = vmatprep.subr.mxu0 0.0
    %482 = vmatpush1.msra.mxu0 0.0
    %483 = vmatprep.subr.mxu0 0.0
    %484 = vmatpush1.msra.mxu0 0.0
    %485 = vmatprep.subr.mxu0 0.0
    %486 = vmatpush1.msra.mxu0 0.0
    %487 = vmatprep.subr.mxu0 0.0
    %488 = vmatpush1.msra.mxu0 0.0
    %489 = vmatprep.subr.mxu0 0.0
    %490 = vmatpush1.msra.mxu0 0.0
    %491 = vmatprep.subr.mxu0 0.0
    %492 = vmatpush1.msra.mxu0 0.0
    %493 = vmatprep.subr.mxu0 0.0
    %494 = vmatpush1.msra.mxu0 0.0
    %495 = vmatprep.mubr.f32.mxu0 0.0
    %v496 = vand.u32 %v56, 4294901760
    %497 = vmatmul.mubr.f32.gmra.mrb[0].mxu0 %v496
    %v498 = vpop.f32.mrb[0].mxu0
    %v499 = vadd.f32 %v408, %v498
    %v500 = vpop.f32.mrb[0].mxu0
    %501 = vmatprep.mubr.f32.mxu0 0.0
    %v502 = vand.u32 %v59, 4294901760
    %503 = vmatmul.mubr.f32.gmra.mrb[0].mxu0 %v502
    %v504 = vpop.f32.mrb[0].mxu0
    %v505 = vadd.f32 %v416, %v504
    %v506 = vpop.f32.mrb[0].mxu0
    %507 = vdwg.mxu0
    %508 = vmatprep.subr.mxu0 0.0
    %v509 = vand.u32 %v50, 4294901760
    %510 = vmatpush1.msra.mxu0 %v509
    %511 = vmatprep.subr.mxu0 0.0
    %v512 = vand.u32 %v51, 4294901760
    %513 = vmatpush1.msra.mxu0 %v512
    %514 = vmatprep.subr.mxu0 0.0
    %v515 = vand.u32 %v52, 4294901760
    %516 = vmatpush1.msra.mxu0 %v515
    %517 = vmatprep.subr.mxu0 0.0
    %v518 = vand.u32 %v53, 4294901760
    %519 = vmatpush1.msra.mxu0 %v518
    %520 = vmatprep.subr.mxu0 0.0
    %521 = vmatpush1.msra.mxu0 0.0
    %522 = vmatprep.subr.mxu0 0.0
    %523 = vmatpush1.msra.mxu0 0.0
    %524 = vmatprep.subr.mxu0 0.0
    %525 = vmatpush1.msra.mxu0 0.0
    %526 = vmatprep.subr.mxu0 0.0
    %527 = vmatpush1.msra.mxu0 0.0
    %528 = vmatprep.subr.mxu0 0.0
    %529 = vmatpush1.msra.mxu0 0.0
    %530 = vmatprep.subr.mxu0 0.0
    %531 = vmatpush1.msra.mxu0 0.0
    %532 = vmatprep.subr.mxu0 0.0
    %533 = vmatpush1.msra.mxu0 0.0
    %534 = vmatprep.subr.mxu0 0.0
    %535 = vmatpush1.msra.mxu0 0.0
    %536 = vmatprep.subr.mxu0 0.0
    %537 = vmatpush1.msra.mxu0 0.0
    %538 = vmatprep.subr.mxu0 0.0
    %539 = vmatpush1.msra.mxu0 0.0
    %540 = vmatprep.subr.mxu0 0.0
    %541 = vmatpush1.msra.mxu0 0.0
    %542 = vmatprep.subr.mxu0 0.0
    %543 = vmatpush1.msra.mxu0 0.0
    %544 = vmatprep.subr.mxu0 0.0
    %545 = vmatpush1.msra.mxu0 0.0
    %546 = vmatprep.subr.mxu0 0.0
    %547 = vmatpush1.msra.mxu0 0.0
    %548 = vmatprep.subr.mxu0 0.0
    %549 = vmatpush1.msra.mxu0 0.0
    %550 = vmatprep.subr.mxu0 0.0
    %551 = vmatpush1.msra.mxu0 0.0
    %552 = vmatprep.subr.mxu0 0.0
    %553 = vmatpush1.msra.mxu0 0.0
    %554 = vmatprep.subr.mxu0 0.0
    %555 = vmatpush1.msra.mxu0 0.0
    %556 = vmatprep.subr.mxu0 0.0
    %557 = vmatpush1.msra.mxu0 0.0
    %558 = vmatprep.subr.mxu0 0.0
    %559 = vmatpush1.msra.mxu0 0.0
    %560 = vmatprep.subr.mxu0 0.0
    %561 = vmatpush1.msra.mxu0 0.0
    %562 = vmatprep.subr.mxu0 0.0
    %563 = vmatpush1.msra.mxu0 0.0
    %564 = vmatprep.subr.mxu0 0.0
    %565 = vmatpush1.msra.mxu0 0.0
    %566 = vmatprep.subr.mxu0 0.0
    %567 = vmatpush1.msra.mxu0 0.0
    %568 = vmatprep.subr.mxu0 0.0
    %569 = vmatpush1.msra.mxu0 0.0
    %570 = vmatprep.subr.mxu0 0.0
    %571 = vmatpush1.msra.mxu0 0.0
    %572 = vmatprep.subr.mxu0 0.0
    %573 = vmatpush1.msra.mxu0 0.0
    %574 = vmatprep.subr.mxu0 0.0
    %575 = vmatpush1.msra.mxu0 0.0
    %576 = vmatprep.mubr.f32.mxu0 0.0
    %v577 = vand.u32 %v56, 4294901760
    %578 = vmatmul.mubr.f32.gmra.mrb[0].mxu0 %v577
    %v579 = vpop.f32.mrb[0].mxu0
    %v580 = vadd.f32 %v499, %v579
    %v581 = vpop.f32.mrb[0].mxu0
    %582 = vmatprep.mubr.f32.mxu0 0.0
    %v583 = vand.u32 %v59, 4294901760
    %584 = vmatmul.mubr.f32.gmra.mrb[0].mxu0 %v583
    %v585 = vpop.f32.mrb[0].mxu0
    %v586 = vadd.f32 %v505, %v585
    %v587 = vpop.f32.mrb[0].mxu0
    %588 = vdwg.mxu0
    %589 = vst [vmem:[#allocation5] sm:$0xff] %v580
    %590 = vst [vmem:[#allocation5 + $0x8] sm:$0xff] %v586
    // Predicated region
    $region14: #{tpu_custom_call.1} parent=1 // pred_check
      _
    $region15: #{tpu_custom_call.1} parent=1 // pred_check_branch
      %592 = sbr.rel (0) target = $region17
    $region16: #{tpu_custom_call.1} parent=1 // pred_region
      %s594 = ssub.s32 256, 256
      %595 = vsyncadd [#allocation4], %s594
      %s596 = sshll.u32 [#allocation5], 4
      %s597 = int_to_ptr.vmem [resolvable:$true] %s596
      %602 = dma.vmem_to_hbm [thread:$0]  %s597, 256, %s2, [#allocation4], 128, 128, 8
    $region17: #{tpu_custom_call.1} parent=1 // pred_fallthru
      _
    // Predicated region
    $region18: #{tpu_custom_call.1} parent=1 // pred_check
      _
    $region19: #{tpu_custom_call.1} parent=1 // pred_check_branch
      %604 = sbr.rel (0) target = $region21
    $region20: #{tpu_custom_call.1} parent=1 // pred_region
      %605 = dma.done [#allocation4], 256
    $region21: #{tpu_custom_call.1} parent=1 // pred_fallthru
      _
    %606 = vsyncpa [#allocation3], 1
    %607 = vsyncpa [#allocation4], 1

</llo_original>
